<compile_context>
chip_gen: v7x
topology: tpu7x:2x2x1
jax: 0.10.0
libtpu: 0.0.40
codegen_flags: <defaults>
</compile_context>

<pallas_src>
import jax
import jax.numpy as jnp
from jax.experimental import pallas as pl
from jax.experimental.pallas import tpu as pltpu


def _round_up(x: int, m: int) -> int:
    return ((x + m - 1) // m) * m


def _fused_affine_tanh_kernel(x_ref, w_ref, b_ref, o_ref):
    """out = tanh(x @ W_eff + b_eff) for both nets at once (W_eff is (30, 2))."""
    x = x_ref[...]
    y = jnp.dot(x, w_ref[...], preferred_element_type=jnp.float32) + b_ref[...]
    o_ref[...] = jnp.tanh(y)


def _fused_forward(features, w_eff, b_eff, *, tile_b=1024):
    """Batch-tiled pallas_call: (B, 30) @ (30, 2) + (1, 2) -> tanh -> (B, 2)."""
    B, D = features.shape
    N = w_eff.shape[1]
    features = features.astype(jnp.float32)

    # Tile over the batch dim. Keep the tile a multiple of 8 (sublane) and pad
    # B up so the grid divides evenly; the 30-wide / 2-wide last dims are exempt
    # from the (8,128) rule because they equal the full array dims.
    tile_b = min(tile_b, _round_up(B, 8))
    b_pad = _round_up(B, tile_b)
    if b_pad != B:
        features = jnp.pad(features, ((0, b_pad - B), (0, 0)))

    grid = (b_pad // tile_b,)
    out = pl.pallas_call(
        _fused_affine_tanh_kernel,
        out_shape=jax.ShapeDtypeStruct((b_pad, N), jnp.float32),
        grid=grid,
        in_specs=[
            pl.BlockSpec((tile_b, D), lambda i: (i, 0)),   # features tile
            pl.BlockSpec((D, N), lambda i: (0, 0)),        # full effective weight
            pl.BlockSpec((1, N), lambda i: (0, 0)),        # full effective bias
        ],
        out_specs=pl.BlockSpec((tile_b, N), lambda i: (i, 0)),
        compiler_params=pltpu.CompilerParams(
            # Batch tiles are independent -> shard across v7x's two TensorCores.
            dimension_semantics=("parallel",),
            # Tiles are ~0.5 MiB double-buffered; default scoped VMEM limits
            # (16 MiB v5e / 32 MiB v6e,v7x) are ample, so no override needed.
        ),
        cost_estimate=pl.CostEstimate(
            flops=2 * b_pad * D * N,
            transcendentals=b_pad * N,
            bytes_accessed=(b_pad * D + D * N + N + b_pad * N) * 4,
        ),
    )(features, w_eff, b_eff)
    return out[:B]


def _collapse_net(params):
    """Collapse Linear-Linear-Linear (no activations) into one affine map.

    Done at HIGHEST precision so the cached effective params don't drift vs.
    an f32 PyTorch reference.
    """
    w1, b1, w2, b2, w3, b3 = params
    hi = jax.lax.Precision.HIGHEST
    w_eff = jnp.dot(jnp.dot(w1, w2, precision=hi), w3, precision=hi)          # (30, 1)
    b_eff = jnp.dot(jnp.dot(b1, w2, precision=hi) + b2, w3, precision=hi) + b3  # (1, 1)
    return w_eff, b_eff


def make_custom_network_big_forward(policy_params, value_params, *, tile_b=1024):
    """Build a jitted forward closed over the cached collapsed weights.

    The collapse + concatenation run exactly once here (outside the hot path);
    the returned callable only does the fused pallas_call + output split.
    """
    w_pi, b_pi = _collapse_net(policy_params)
    w_vf, b_vf = _collapse_net(value_params)
    w_eff = jnp.concatenate([w_pi, w_vf], axis=1)   # (30, 2)
    b_eff = jnp.concatenate([b_pi, b_vf], axis=1)   # (1, 2)
    w_eff, b_eff = jax.block_until_ready((w_eff, b_eff))  # materialize once

    @jax.jit
    def forward(features):
        out = _fused_forward(features, w_eff, b_eff, tile_b=tile_b)  # (B, 2)
        return out[:, 0:1], out[:, 1:2]            # (actor, critic)

    return forward


def custom_network_big_forward(features, policy_params, value_params):
    """One-shot convenience wrapper (prefer the cached factory above)."""
    return make_custom_network_big_forward(policy_params, value_params)(features)


def init_params(key, dims=(30, 64, 32, 1)):
    """Deterministic synthetic init (PyTorch-Linear-style uniform bounds)."""
    params = []
    for din, dout in zip(dims[:-1], dims[1:]):
        key, kw, kb = jax.random.split(key, 3)
        bound = 1.0 / jnp.sqrt(jnp.float32(din))
        w = jax.random.uniform(kw, (din, dout), jnp.float32, -bound, bound)
        b = jax.random.uniform(kb, (1, dout), jnp.float32, -bound, bound)
        params += [w, b]
    return tuple(params)


def _reference_mlp(x, params):
    """Un-collapsed pure-JAX reference (f32 HIGHEST precision)."""
    hi = jax.lax.Precision.HIGHEST
    w1, b1, w2, b2, w3, b3 = params
    h = jnp.dot(x, w1, precision=hi) + b1
    h = jnp.dot(h, w2, precision=hi) + b2
    h = jnp.dot(h, w3, precision=hi) + b3
    return jnp.tanh(h)


if __name__ == "__main__":
    key = jax.random.PRNGKey(0)
    k_x, k_pi, k_vf = jax.random.split(key, 3)

    policy_params = init_params(k_pi)
    value_params = init_params(k_vf)
    forward = make_custom_network_big_forward(policy_params, value_params)

    # --- small batch (single grid step, full-block path) ---
    B = 8
    features = jax.random.normal(k_x, (B, 30), jnp.float32)
    pi, vf = forward(features)
    jax.block_until_ready((pi, vf))

    pi_ref = _reference_mlp(features, policy_params)
    vf_ref = _reference_mlp(features, value_params)
    assert pi.shape == (B, 1) and vf.shape == (B, 1)
    assert jnp.allclose(pi, pi_ref, atol=2e-3), float(jnp.max(jnp.abs(pi - pi_ref)))
    assert jnp.allclose(vf, vf_ref, atol=2e-3), float(jnp.max(jnp.abs(vf - vf_ref)))

    # --- ragged batch (exercises the multi-step grid + padding path) ---
    forward_tiled = make_custom_network_big_forward(
        policy_params, value_params, tile_b=256)
    B2 = 600
    feats2 = jax.random.normal(jax.random.PRNGKey(1), (B2, 30), jnp.float32)
    pi2, vf2 = forward_tiled(feats2)
    jax.block_until_ready((pi2, vf2))

    pi2_ref = _reference_mlp(feats2, policy_params)
    vf2_ref = _reference_mlp(feats2, value_params)
    assert pi2.shape == (B2, 1) and vf2.shape == (B2, 1)
    assert jnp.allclose(pi2, pi2_ref, atol=2e-3), float(jnp.max(jnp.abs(pi2 - pi2_ref)))
    assert jnp.allclose(vf2, vf2_ref, atol=2e-3), float(jnp.max(jnp.abs(vf2 - vf2_ref)))

    print("KERNEL_OK")
</pallas_src>

<mosaic_0001>
module attributes {stable_mosaic.version = 11 : i64} {
  func.func @_fused_affine_tanh_kernel(%arg0: i32, %arg1: memref<8x30xf32, #tpu.memory_space<vmem>>, %arg2: memref<30x2xf32, #tpu.memory_space<vmem>>, %arg3: memref<1x2xf32, #tpu.memory_space<vmem>>, %arg4: memref<8x2xf32, #tpu.memory_space<vmem>>) attributes {dimension_semantics = [#tpu.dimension_semantics<parallel>], iteration_bounds = array<i64: 1>, scalar_prefetch = 0 : i64, scratch_operands = 0 : i64, tpu.core_type = #tpu.core_type<tc>, window_params = [{transform_indices = @transform_0, window_bounds = array<i64: 8, 30>}, {pipeline_mode = #tpu.pipeline_mode<synchronous>, transform_indices = @transform_1, window_bounds = array<i64: 30, 2>}, {pipeline_mode = #tpu.pipeline_mode<synchronous>, transform_indices = @transform_2, window_bounds = array<i64: 1, 2>}, {transform_indices = @transform_3, window_bounds = array<i64: 8, 2>}]} {
    %c0 = arith.constant 0 : index
    %c0_0 = arith.constant 0 : index
    %0 = vector.load %arg1[%c0, %c0_0] : memref<8x30xf32, #tpu.memory_space<vmem>>, vector<8x30xf32>
    %c0_1 = arith.constant 0 : index
    %c0_2 = arith.constant 0 : index
    %1 = vector.load %arg2[%c0_1, %c0_2] : memref<30x2xf32, #tpu.memory_space<vmem>>, vector<30x2xf32>
    %cst = arith.constant dense<0.000000e+00> : vector<8x2xf32>
    %2 = tpu.matmul %0, %1, %cst {dimension_numbers = #tpu.dot_dimension_numbers<[1], [0], [0], [1], [0, 0, 1, 1], [], []>} : vector<8x30xf32>, vector<30x2xf32>, vector<8x2xf32> -> vector<8x2xf32>
    %c0_3 = arith.constant 0 : index
    %c0_4 = arith.constant 0 : index
    %3 = vector.load %arg3[%c0_3, %c0_4] : memref<1x2xf32, #tpu.memory_space<vmem>>, vector<1x2xf32>
    %4 = vector.broadcast %3 : vector<1x2xf32> to vector<8x2xf32>
    %5 = arith.addf %2, %4 : vector<8x2xf32>
    %6 = math.tanh %5 : vector<8x2xf32>
    %c0_5 = arith.constant 0 : index
    %c0_6 = arith.constant 0 : index
    %7 = vector.load %arg4[%c0_5, %c0_6] : memref<8x2xf32, #tpu.memory_space<vmem>>, vector<8x2xf32>
    tpu.vector_store %arg4[%c0_5, %c0_6], %6 {strides = array<i32>} : memref<8x2xf32, #tpu.memory_space<vmem>>, vector<8x2xf32>,
    return
  }
  func.func @transform_0(%arg0: i32) -> (i32, i32) {
    %c0_i32 = arith.constant 0 : i32
    %c0_i32_0 = arith.constant 0 : i32
    return %arg0, %c0_i32 : i32, i32
  }
  func.func @transform_1(%arg0: i32) -> (i32, i32) {
    %c0_i32 = arith.constant 0 : i32
    %c0_i32_0 = arith.constant 0 : i32
    %c0_i32_1 = arith.constant 0 : i32
    return %c0_i32, %c0_i32_0 : i32, i32
  }
  func.func @transform_2(%arg0: i32) -> (i32, i32) {
    %c0_i32 = arith.constant 0 : i32
    %c0_i32_0 = arith.constant 0 : i32
    %c0_i32_1 = arith.constant 0 : i32
    return %c0_i32, %c0_i32_0 : i32, i32
  }
  func.func @transform_3(%arg0: i32) -> (i32, i32) {
    %c0_i32 = arith.constant 0 : i32
    %c0_i32_0 = arith.constant 0 : i32
    return %arg0, %c0_i32 : i32, i32
  }
}

</mosaic_0001>

<llo_original>
// kernel: forward.1
$region0: #{forward.1}
  #allocation0 [shape = 'u32[]', space=smem, size = 0x4, offset = 0x4, fixed_abs, tag = 'smem constant byte address 0x4 - core index']
  #allocation1 [shape = 'u32[144,128]{1,0:T(1,128)}', space=vmem, size = 0x12000, scoped, tag = 'internal scratch']
  %s0 = inlined_call_operand.hbm [shape: f32[8,30], index: 0, kind: input, shape index: {}]
  %s1 = inlined_call_operand.hbm [shape: f32[30,2], index: 1, kind: input, shape index: {}]
  %s2 = inlined_call_operand.vmem [shape: f32[1,2], index: 2, kind: input, shape index: {}]
  %s3 = inlined_call_operand.vmem [shape: f32[8,2], index: 3, kind: output, shape index: {}]
  %s4 = sld [smem:[#allocation0]]
  $region30: #{forward.1} parent=0
    _
  %s6 = ssub.s32 1, %s4
  %s7 = scalar_select 0, %s6, %s4
  $region1: #{forward.1} parent=0
    #allocation2 [shape = 'u8[4096]{0}', space=vmem, size = 0x1000, scoped, tag = 'input window, operand 0, single buffered']
    #allocation3 [shape = 's32[1]{0}', space=sflag, size = 0x4, scoped, tag = 'scoped memory for forward.1']
    #allocation4 [shape = 'u8[16384]{0}', space=vmem, size = 0x4000, scoped, tag = 'input window, operand 1, single buffered']
    #allocation5 [shape = 's32[1]{0}', space=sflag, size = 0x4, scoped, tag = 'scoped memory for forward.1']
    %8 = vsyncpa [#allocation3], 0
    %9 = vsyncpa [#allocation5], 0
    // Predicated region
    $region2: #{forward.1} parent=1 // pred_check
      _
    $region3: #{forward.1} parent=1 // pred_check_branch
      %11 = sbr.rel (0) target = $region5
    $region4: #{forward.1} parent=1 // pred_region
      %s13 = ssub.s32 128, 128
      %14 = vsyncadd [#allocation3], %s13
      %s16 = sshll.u32 [#allocation2], 4
      %s17 = int_to_ptr.vmem [resolvable:$true] %s16
      %19 = dma.hbm_to_vmem [thread:$0]  %s0, 128, %s17, [#allocation3]
    $region5: #{forward.1} parent=1 // pred_fallthru
      _
    // Predicated region
    $region6: #{forward.1} parent=1 // pred_check
      _
    $region7: #{forward.1} parent=1 // pred_check_branch
      %21 = sbr.rel (0) target = $region9
    $region8: #{forward.1} parent=1 // pred_region
      %s23 = ssub.s32 512, 512
      %24 = vsyncadd [#allocation5], %s23
      %s25 = sshll.u32 [#allocation4], 4
      %s26 = int_to_ptr.vmem [resolvable:$true] %s25
      %31 = dma.hbm_to_vmem [thread:$0]  %s1, 512, %s26, [#allocation5], 128, 128, 8
    $region9: #{forward.1} parent=1 // pred_fallthru
      _
    // Predicated region
    $region10: #{forward.1} parent=1 // pred_check
      _
    $region11: #{forward.1} parent=1 // pred_check_branch
      %33 = sbr.rel (0) target = $region13
    $region12: #{forward.1} parent=1 // pred_region
      _
    $region13: #{forward.1} parent=1 // pred_fallthru
      _
    // Predicated region
    $region14: #{forward.1} parent=1 // pred_check
      _
    $region15: #{forward.1} parent=1 // pred_check_branch
      %35 = sbr.rel (0) target = $region17
    $region16: #{forward.1} parent=1 // pred_region
      %36 = dma.done [#allocation3], 128
    $region17: #{forward.1} parent=1 // pred_fallthru
      _
    // Predicated region
    $region18: #{forward.1} parent=1 // pred_check
      _
    $region19: #{forward.1} parent=1 // pred_check_branch
      %38 = sbr.rel (0) target = $region21
    $region20: #{forward.1} parent=1 // pred_region
      %39 = dma.done [#allocation5], 512
    $region21: #{forward.1} parent=1 // pred_fallthru
      _
    %v40 = vld [vmem:[#allocation2] sm:$0xff]
    %v41 = vld [vmem:[#allocation4] sm:$0xff]
    %v42 = vld [vmem:[#allocation4 + $0x8] sm:$0xff]
    %v43 = vld [vmem:[#allocation4 + $0x10] sm:$0xff]
    %v44 = vld [vmem:[#allocation4 + $0x18] sm:$0x3f]
    %v45 = vld [vmem:[%s2] sm:$0x1]
    %v47 = vlaneseq
    %v48 = vshrl.u32 %v47, 7
    %v49 = vsub.s32 0, %v48
    %v50 = vrot.slane %v45, %v49
    %vm52 = vcmask 244736
    %v54 = vsel %vm52, %v40, 0
    %vm56 = vcmask 1045504
    %v58 = vsel %vm56, %v44, 0
    %60 = vmatprep.subr.mxu0 0.0
    %61 = vmatpush1.msra.mxu0 %v41
    %62 = vmatprep.subr.mxu0 0.0
    %63 = vmatpush1.msra.mxu0 %v42
    %64 = vmatprep.subr.mxu0 0.0
    %65 = vmatpush1.msra.mxu0 %v43
    %66 = vmatprep.subr.mxu0 0.0
    %67 = vmatpush1.msra.mxu0 %v58
    %68 = vmatprep.subr.mxu0 0.0
    %69 = vmatpush1.msra.mxu0 0.0
    %70 = vmatprep.subr.mxu0 0.0
    %71 = vmatpush1.msra.mxu0 0.0
    %72 = vmatprep.subr.mxu0 0.0
    %73 = vmatpush1.msra.mxu0 0.0
    %74 = vmatprep.subr.mxu0 0.0
    %75 = vmatpush1.msra.mxu0 0.0
    %76 = vmatprep.subr.mxu0 0.0
    %77 = vmatpush1.msra.mxu0 0.0
    %78 = vmatprep.subr.mxu0 0.0
    %79 = vmatpush1.msra.mxu0 0.0
    %80 = vmatprep.subr.mxu0 0.0
    %81 = vmatpush1.msra.mxu0 0.0
    %82 = vmatprep.subr.mxu0 0.0
    %83 = vmatpush1.msra.mxu0 0.0
    %84 = vmatprep.subr.mxu0 0.0
    %85 = vmatpush1.msra.mxu0 0.0
    %86 = vmatprep.subr.mxu0 0.0
    %87 = vmatpush1.msra.mxu0 0.0
    %88 = vmatprep.subr.mxu0 0.0
    %89 = vmatpush1.msra.mxu0 0.0
    %90 = vmatprep.subr.mxu0 0.0
    %91 = vmatpush1.msra.mxu0 0.0
    %92 = vmatprep.subr.mxu0 0.0
    %93 = vmatpush1.msra.mxu0 0.0
    %94 = vmatprep.subr.mxu0 0.0
    %95 = vmatpush1.msra.mxu0 0.0
    %96 = vmatprep.subr.mxu0 0.0
    %97 = vmatpush1.msra.mxu0 0.0
    %98 = vmatprep.subr.mxu0 0.0
    %99 = vmatpush1.msra.mxu0 0.0
    %100 = vmatprep.subr.mxu0 0.0
    %101 = vmatpush1.msra.mxu0 0.0
    %102 = vmatprep.subr.mxu0 0.0
    %103 = vmatpush1.msra.mxu0 0.0
    %104 = vmatprep.subr.mxu0 0.0
    %105 = vmatpush1.msra.mxu0 0.0
    %106 = vmatprep.subr.mxu0 0.0
    %107 = vmatpush1.msra.mxu0 0.0
    %108 = vmatprep.subr.mxu0 0.0
    %109 = vmatpush1.msra.mxu0 0.0
    %110 = vmatprep.subr.mxu0 0.0
    %111 = vmatpush1.msra.mxu0 0.0
    %112 = vmatprep.subr.mxu0 0.0
    %113 = vmatpush1.msra.mxu0 0.0
    %114 = vmatprep.subr.mxu0 0.0
    %115 = vmatpush1.msra.mxu0 0.0
    %116 = vmatprep.subr.mxu0 0.0
    %117 = vmatpush1.msra.mxu0 0.0
    %118 = vmatprep.subr.mxu0 0.0
    %119 = vmatpush1.msra.mxu0 0.0
    %120 = vmatprep.subr.mxu0 0.0
    %121 = vmatpush1.msra.mxu0 0.0
    %122 = vmatprep.subr.mxu0 0.0
    %123 = vmatpush1.msra.mxu0 0.0
    %124 = vmatprep.mubr.f32.mxu0 0.0
    %125 = vmatmul.mubr.f32.gmra.mrb[0].mxu0 %v54
    %v126 = vpop.f32.mrb[0].mxu0
    %v127 = vadd.f32 %v50, %v126
    %v128 = vpop.f32.mrb[0].mxu0
    %129 = vdwg.mxu0
    %v130 = vtanh.pop %v127
    %vm131 = vcmask 15360
    %132 = vst.msk [vmem:[%s3] sm:$0xff] %vm131, %v130
    // Predicated region
    $region22: #{forward.1} parent=1 // pred_check
      _
    $region23: #{forward.1} parent=1 // pred_check_branch
      %134 = sbr.rel (0) target = $region25
    $region24: #{forward.1} parent=1 // pred_region
      _
    $region25: #{forward.1} parent=1 // pred_fallthru
      _
    // Predicated region
    $region26: #{forward.1} parent=1 // pred_check
      _
    $region27: #{forward.1} parent=1 // pred_check_branch
      %136 = sbr.rel (0) target = $region29
    $region28: #{forward.1} parent=1 // pred_region
      _
    $region29: #{forward.1} parent=1 // pred_fallthru
      _
    %137 = vsyncpa [#allocation3], 1
    %138 = vsyncpa [#allocation5], 1

</llo_original>
